<compile_context>
chip_gen: v5e
topology: v5e:2x2
jax: 0.10.0
libtpu: 0.0.40
codegen_flags: <defaults>
</compile_context>

<pallas_src>
import jax
import jax.numpy as jnp
from jax.experimental import pallas as pl
from jax.experimental.pallas import tpu as pltpu

SUBLANE = 8  # f32 sublane width


def _round_up(n, m):
    return ((n + m - 1) // m) * m


def _mlp_chain_kernel(x_ref, w1_ref, b1_ref, w2_ref, b2_ref, o_ref):
    """Fused forward of CustomLayer([Linear, ReLU, Linear]) for one batch tile.

    x_ref  : (TB, D_in)   f32   (cast to bf16 in-kernel for the MXU)
    w1_ref : (D_in, H)    bf16
    b1_ref : (1, H)       f32
    w2_ref : (H, D_out)   bf16
    b2_ref : (1, D_out)   f32
    o_ref  : (TB, D_out)  f32
    """
    x = x_ref[...].astype(jnp.bfloat16)
    # layer 0: Linear(in -> hidden), bf16 MXU operands, f32 accumulation
    h = jnp.dot(x, w1_ref[...], preferred_element_type=jnp.float32)
    # bias add + ReLU in f32 on the VPU
    h = jnp.maximum(h + b1_ref[...], 0.0)
    # layer 2: Linear(hidden -> out)
    y = jnp.dot(h.astype(jnp.bfloat16), w2_ref[...],
                preferred_element_type=jnp.float32)
    o_ref[...] = y + b2_ref[...]


def prepare_params(w1, b1, w2, b2):
    """One-time parameter prep (hoisted out of the per-call wrapper):
    matmul operands -> bf16, biases stay f32 and are shaped (1, F)."""
    return (w1.astype(jnp.bfloat16),
            b1.reshape(1, -1).astype(jnp.float32),
            w2.astype(jnp.bfloat16),
            b2.reshape(1, -1).astype(jnp.float32))


def custom_layer_forward(x, params, *, block_b=8192):
    """Run the fused CustomLayer forward as one pallas_call.

    x      : (B, D_in) float32
    params : output of prepare_params (w1 bf16 (D_in,H), b1 f32 (1,H),
             w2 bf16 (H,D_out), b2 f32 (1,D_out));
             w1/w2 are transposed vs torch.nn.Linear.weight.
    returns (B, D_out) float32 — no padding, no post-call slicing.
    """
    w1, b1, w2, b2 = params
    B, D_in = x.shape
    H = w1.shape[1]
    D_out = w2.shape[1]

    # Batch tile: multiple of the f32 sublane width, capped so there are at
    # least 2 grid steps when B allows (v7x: both TensorCores get work), and
    # capped at block_b to bound VMEM. Last tile may be partial; Pallas masks
    # the out-of-bounds writeback.
    half = _round_up(max(pl.cdiv(B, 2), SUBLANE), SUBLANE)
    tb = min(_round_up(block_b, SUBLANE), half)
    grid = (pl.cdiv(B, tb),)

    return pl.pallas_call(
        _mlp_chain_kernel,
        out_shape=jax.ShapeDtypeStruct((B, D_out), jnp.float32),
        grid=grid,
        in_specs=[
            # batch-tiled activation; last dim = full extent (< 128 is legal
            # because it equals the array dim)
            pl.BlockSpec((tb, D_in), lambda i: (i, 0)),
            # weights / biases: constant index_map -> VMEM-resident, DMA'd once
            pl.BlockSpec((D_in, H), lambda i: (0, 0)),
            pl.BlockSpec((1, H), lambda i: (0, 0)),
            pl.BlockSpec((H, D_out), lambda i: (0, 0)),
            pl.BlockSpec((1, D_out), lambda i: (0, 0)),
        ],
        out_specs=pl.BlockSpec((tb, D_out), lambda i: (i, 0)),
        compiler_params=pltpu.CompilerParams(
            dimension_semantics=("parallel",),   # shards batch across v7x TCs
        ),
    )(x, w1, b1, w2, b2)


def _reference_forward(x, w1, b1, w2, b2):
    h = jnp.maximum(x @ w1 + b1, 0.0)
    return h @ w2 + b2


if __name__ == "__main__":
    # Small synthetic instantiation of the sequential CustomLayer.
    B, D_in, H, D_out = 64, 32, 64, 32

    key = jax.random.PRNGKey(0)
    kx, kw1, kb1, kw2, kb2 = jax.random.split(key, 5)

    x = jax.random.normal(kx, (B, D_in), dtype=jnp.float32)

    # Deterministic PyTorch-like uniform init: bound = 1/sqrt(fan_in).
    bound1 = 1.0 / (D_in ** 0.5)
    bound2 = 1.0 / (H ** 0.5)
    w1 = jax.random.uniform(kw1, (D_in, H), jnp.float32, -bound1, bound1)
    b1 = jax.random.uniform(kb1, (1, H), jnp.float32, -bound1, bound1)
    w2 = jax.random.uniform(kw2, (H, D_out), jnp.float32, -bound2, bound2)
    b2 = jax.random.uniform(kb2, (1, D_out), jnp.float32, -bound2, bound2)

    params = prepare_params(w1, b1, w2, b2)

    # block_b=32 so the small test batch still exercises multiple grid steps.
    out = custom_layer_forward(x, params, block_b=32)
    out = jax.block_until_ready(out)

    ref = _reference_forward(x, w1, b1, w2, b2)
    assert out.shape == (B, D_out)
    # bf16 matmul operands (f32 accumulation) -> relaxed tolerance vs f32 ref.
    assert jnp.allclose(out, ref, atol=2e-2, rtol=2e-2), float(
        jnp.max(jnp.abs(out - ref)))

    # TODO(synk): train_model / evaluate are host-side training loops
    # (optimizer, DataLoader, loss bookkeeping) with no Pallas equivalent;
    # only the forward pass is implemented here.
    print("KERNEL_OK")
</pallas_src>

<mosaic_0001>
module attributes {stable_mosaic.version = 11 : i64} {
  func.func @_mlp_chain_kernel(%arg0: i32, %arg1: memref<32x32xf32, #tpu.memory_space<vmem>>, %arg2: memref<32x64xbf16, #tpu.memory_space<vmem>>, %arg3: memref<1x64xf32, #tpu.memory_space<vmem>>, %arg4: memref<64x32xbf16, #tpu.memory_space<vmem>>, %arg5: memref<1x32xf32, #tpu.memory_space<vmem>>, %arg6: memref<32x32xf32, #tpu.memory_space<vmem>>) attributes {dimension_semantics = [#tpu.dimension_semantics<parallel>], iteration_bounds = array<i64: 2>, scalar_prefetch = 0 : i64, scratch_operands = 0 : i64, tpu.core_type = #tpu.core_type<tc>, window_params = [{transform_indices = @transform_0, window_bounds = array<i64: 32, 32>}, {pipeline_mode = #tpu.pipeline_mode<synchronous>, transform_indices = @transform_1, window_bounds = array<i64: 32, 64>}, {pipeline_mode = #tpu.pipeline_mode<synchronous>, transform_indices = @transform_2, window_bounds = array<i64: 1, 64>}, {pipeline_mode = #tpu.pipeline_mode<synchronous>, transform_indices = @transform_3, window_bounds = array<i64: 64, 32>}, {pipeline_mode = #tpu.pipeline_mode<synchronous>, transform_indices = @transform_4, window_bounds = array<i64: 1, 32>}, {transform_indices = @transform_5, window_bounds = array<i64: 32, 32>}]} {
    %c0 = arith.constant 0 : index
    %c0_0 = arith.constant 0 : index
    %0 = vector.load %arg1[%c0, %c0_0] : memref<32x32xf32, #tpu.memory_space<vmem>>, vector<32x32xf32>
    %1 = arith.truncf %0 : vector<32x32xf32> to vector<32x32xbf16>
    %c0_1 = arith.constant 0 : index
    %c0_2 = arith.constant 0 : index
    %2 = vector.load %arg2[%c0_1, %c0_2] : memref<32x64xbf16, #tpu.memory_space<vmem>>, vector<32x64xbf16>
    %cst = arith.constant dense<0.000000e+00> : vector<32x64xf32>
    %3 = tpu.matmul %1, %2, %cst {dimension_numbers = #tpu.dot_dimension_numbers<[1], [0], [0], [1], [0, 0, 1, 1], [], []>} : vector<32x32xbf16>, vector<32x64xbf16>, vector<32x64xf32> -> vector<32x64xf32>
    %c0_3 = arith.constant 0 : index
    %c0_4 = arith.constant 0 : index
    %4 = vector.load %arg3[%c0_3, %c0_4] : memref<1x64xf32, #tpu.memory_space<vmem>>, vector<1x64xf32>
    %5 = vector.broadcast %4 : vector<1x64xf32> to vector<32x64xf32>
    %6 = arith.addf %3, %5 : vector<32x64xf32>
    %cst_5 = arith.constant 0.000000e+00 : f32
    %7 = vector.broadcast %cst_5 : f32 to vector<32x64xf32>
    %8 = arith.maximumf %6, %7 : vector<32x64xf32>
    %9 = arith.truncf %8 : vector<32x64xf32> to vector<32x64xbf16>
    %c0_6 = arith.constant 0 : index
    %c0_7 = arith.constant 0 : index
    %10 = vector.load %arg4[%c0_6, %c0_7] : memref<64x32xbf16, #tpu.memory_space<vmem>>, vector<64x32xbf16>
    %cst_8 = arith.constant dense<0.000000e+00> : vector<32x32xf32>
    %11 = tpu.matmul %9, %10, %cst_8 {dimension_numbers = #tpu.dot_dimension_numbers<[1], [0], [0], [1], [0, 0, 1, 1], [], []>} : vector<32x64xbf16>, vector<64x32xbf16>, vector<32x32xf32> -> vector<32x32xf32>
    %c0_9 = arith.constant 0 : index
    %c0_10 = arith.constant 0 : index
    %12 = vector.load %arg5[%c0_9, %c0_10] : memref<1x32xf32, #tpu.memory_space<vmem>>, vector<1x32xf32>
    %13 = vector.broadcast %12 : vector<1x32xf32> to vector<32x32xf32>
    %14 = arith.addf %11, %13 : vector<32x32xf32>
    %c0_11 = arith.constant 0 : index
    %c0_12 = arith.constant 0 : index
    %15 = vector.load %arg6[%c0_11, %c0_12] : memref<32x32xf32, #tpu.memory_space<vmem>>, vector<32x32xf32>
    tpu.vector_store %arg6[%c0_11, %c0_12], %14 {strides = array<i32>} : memref<32x32xf32, #tpu.memory_space<vmem>>, vector<32x32xf32>,
    return
  }
  func.func @transform_0(%arg0: i32) -> (i32, i32) {
    %c0_i32 = arith.constant 0 : i32
    %c0_i32_0 = arith.constant 0 : i32
    return %arg0, %c0_i32 : i32, i32
  }
  func.func @transform_1(%arg0: i32) -> (i32, i32) {
    %c0_i32 = arith.constant 0 : i32
    %c0_i32_0 = arith.constant 0 : i32
    %c0_i32_1 = arith.constant 0 : i32
    return %c0_i32, %c0_i32_0 : i32, i32
  }
  func.func @transform_2(%arg0: i32) -> (i32, i32) {
    %c0_i32 = arith.constant 0 : i32
    %c0_i32_0 = arith.constant 0 : i32
    %c0_i32_1 = arith.constant 0 : i32
    return %c0_i32, %c0_i32_0 : i32, i32
  }
  func.func @transform_3(%arg0: i32) -> (i32, i32) {
    %c0_i32 = arith.constant 0 : i32
    %c0_i32_0 = arith.constant 0 : i32
    %c0_i32_1 = arith.constant 0 : i32
    return %c0_i32, %c0_i32_0 : i32, i32
  }
  func.func @transform_4(%arg0: i32) -> (i32, i32) {
    %c0_i32 = arith.constant 0 : i32
    %c0_i32_0 = arith.constant 0 : i32
    %c0_i32_1 = arith.constant 0 : i32
    return %c0_i32, %c0_i32_0 : i32, i32
  }
  func.func @transform_5(%arg0: i32) -> (i32, i32) {
    %c0_i32 = arith.constant 0 : i32
    %c0_i32_0 = arith.constant 0 : i32
    return %arg0, %c0_i32 : i32, i32
  }
}

</mosaic_0001>

<llo_original>
// kernel: tpu_custom_call.1
$region0: #{tpu_custom_call.1}
  #allocation0 [shape = 'u32[]', space=smem, size = 0x4, offset = 0x4, fixed_abs, tag = 'smem constant byte address 0x4 - core index']
  #allocation1 [shape = 'u32[72,128]{1,0:T(1,128)}', space=vmem, size = 0x9000, scoped, tag = 'internal scratch']
  %s0 = inlined_call_operand.vmem [shape: f32[64,32], index: 0, kind: input, shape index: {}]
  %s1 = inlined_call_operand.vmem [shape: bf16[32,64], index: 1, kind: input, shape index: {}]
  %s2 = inlined_call_operand.vmem [shape: f32[1,64], index: 2, kind: input, shape index: {}]
  %s3 = inlined_call_operand.vmem [shape: bf16[64,32], index: 3, kind: input, shape index: {}]
  %s4 = inlined_call_operand.vmem [shape: f32[1,32], index: 4, kind: input, shape index: {}]
  %s5 = inlined_call_operand.vmem [shape: f32[64,32], index: 5, kind: output, shape index: {}]
  %s6 = sld [smem:[#allocation0]]
  $region53: #{tpu_custom_call.1} parent=0
    _
  %s8 = ssub.s32 1, %s6
  %s9 = scalar_select 0, %s8, %s6
  loop: start=0, step=1, limit=4
  $region2: #{tpu_custom_call.1} parent=0 // loop_pre_header
    _
  $region3: #{tpu_custom_call.1} parent=0 // loop_header
    %s11 = sphi 0, %s15
    %p12 = scmp.ge.s32.totalorder %s11, 4
    %s21 = sphi 0, %s23
    %s24 = sphi 0, %s21
    %s25 = sphi 0, %s24
    %s41 = sphi 0, %s25
    %s45 = sphi 0, %s45
    %s47 = sphi 0, %s45
    %s48 = sphi 0, %s47
    %s62 = sphi 0, %s48
    %s66 = sphi 0, %s66
    %s68 = sphi 0, %s66
    %s69 = sphi 0, %s68
    %s83 = sphi 0, %s69
    %s87 = sphi 0, %s87
    %s89 = sphi 0, %s87
    %s90 = sphi 0, %s89
    %s104 = sphi 0, %s90
    %s108 = sphi 0, %s108
    %s110 = sphi 0, %s108
    %s111 = sphi 0, %s110
    %s125 = sphi 0, %s111
    %s131 = sphi 0, %s133
    %s134 = sphi 0, %s131
    %s135 = sphi 0, %s134
    %s151 = sphi 0, %s135
  $region4: #{tpu_custom_call.1} parent=0 // loop_header_branch
    %14 = sbr.rel (%p12) target = $region8
  $region5: #{tpu_custom_call.1} parent=0 // loop_body
    %s16 = ssub.s32 %s11, 1
    %s17 = ssub.s32 %s11, 2
    %s18 = sadd.s32 %s11, 1
    %s19 = ssub.s32 %s11, %s18
    %p20 = scmp.eq.s32.totalorder %s19, 0
    %s22 = sadd.s32 %s21, 1
    %s23 = scalar_select %p20, %s21, %s22
    %p26 = pneg %p20
    %p27 = scmp.eq.s32.totalorder %s11, 1
    %p28 = por %p26, %p27
    %p29 = scmp.ne.s32.totalorder %s21, %s24
    %p30 = scmp.eq.s32.totalorder %s11, 0
    %p31 = por %p29, %p30
    %p32 = scmp.ne.s32.totalorder %s21, %s24
    %p33 = scmp.eq.s32.totalorder %s16, 1
    %p34 = por %p32, %p33
    %p35 = scmp.ne.s32.totalorder %s24, %s25
    %p36 = scmp.eq.s32.totalorder %s16, 0
    %p37 = por %p35, %p36
    %p38 = scmp.ne.s32.totalorder %s24, %s25
    %p39 = scmp.eq.s32.totalorder %s17, 1
    %p40 = por %p38, %p39
    %p42 = scmp.ne.s32.totalorder %s25, %s41
    %p43 = scmp.eq.s32.totalorder %s17, 0
    %p44 = por %p42, %p43
    %s46 = sadd.s32 %s45, 1
    %p49 = scmp.eq.s32.totalorder %s11, 1
    %p50 = scmp.ne.s32.totalorder %s45, %s47
    %p51 = scmp.eq.s32.totalorder %s11, 0
    %p52 = por %p50, %p51
    %p53 = scmp.ne.s32.totalorder %s45, %s47
    %p54 = scmp.eq.s32.totalorder %s16, 1
    %p55 = por %p53, %p54
    %p56 = scmp.ne.s32.totalorder %s47, %s48
    %p57 = scmp.eq.s32.totalorder %s16, 0
    %p58 = por %p56, %p57
    %p59 = scmp.ne.s32.totalorder %s47, %s48
    %p60 = scmp.eq.s32.totalorder %s17, 1
    %p61 = por %p59, %p60
    %p63 = scmp.ne.s32.totalorder %s48, %s62
    %p64 = scmp.eq.s32.totalorder %s17, 0
    %p65 = por %p63, %p64
    %s67 = sadd.s32 %s66, 1
    %p70 = scmp.eq.s32.totalorder %s11, 1
    %p71 = scmp.ne.s32.totalorder %s66, %s68
    %p72 = scmp.eq.s32.totalorder %s11, 0
    %p73 = por %p71, %p72
    %p74 = scmp.ne.s32.totalorder %s66, %s68
    %p75 = scmp.eq.s32.totalorder %s16, 1
    %p76 = por %p74, %p75
    %p77 = scmp.ne.s32.totalorder %s68, %s69
    %p78 = scmp.eq.s32.totalorder %s16, 0
    %p79 = por %p77, %p78
    %p80 = scmp.ne.s32.totalorder %s68, %s69
    %p81 = scmp.eq.s32.totalorder %s17, 1
    %p82 = por %p80, %p81
    %p84 = scmp.ne.s32.totalorder %s69, %s83
    %p85 = scmp.eq.s32.totalorder %s17, 0
    %p86 = por %p84, %p85
    %s88 = sadd.s32 %s87, 1
    %p91 = scmp.eq.s32.totalorder %s11, 1
    %p92 = scmp.ne.s32.totalorder %s87, %s89
    %p93 = scmp.eq.s32.totalorder %s11, 0
    %p94 = por %p92, %p93
    %p95 = scmp.ne.s32.totalorder %s87, %s89
    %p96 = scmp.eq.s32.totalorder %s16, 1
    %p97 = por %p95, %p96
    %p98 = scmp.ne.s32.totalorder %s89, %s90
    %p99 = scmp.eq.s32.totalorder %s16, 0
    %p100 = por %p98, %p99
    %p101 = scmp.ne.s32.totalorder %s89, %s90
    %p102 = scmp.eq.s32.totalorder %s17, 1
    %p103 = por %p101, %p102
    %p105 = scmp.ne.s32.totalorder %s90, %s104
    %p106 = scmp.eq.s32.totalorder %s17, 0
    %p107 = por %p105, %p106
    %s109 = sadd.s32 %s108, 1
    %p112 = scmp.eq.s32.totalorder %s11, 1
    %p113 = scmp.ne.s32.totalorder %s108, %s110
    %p114 = scmp.eq.s32.totalorder %s11, 0
    %p115 = por %p113, %p114
    %p116 = scmp.ne.s32.totalorder %s108, %s110
    %p117 = scmp.eq.s32.totalorder %s16, 1
    %p118 = por %p116, %p117
    %p119 = scmp.ne.s32.totalorder %s110, %s111
    %p120 = scmp.eq.s32.totalorder %s16, 0
    %p121 = por %p119, %p120
    %p122 = scmp.ne.s32.totalorder %s110, %s111
    %p123 = scmp.eq.s32.totalorder %s17, 1
    %p124 = por %p122, %p123
    %p126 = scmp.ne.s32.totalorder %s111, %s125
    %p127 = scmp.eq.s32.totalorder %s17, 0
    %p128 = por %p126, %p127
    %s129 = ssub.s32 %s11, %s18
    %p130 = scmp.eq.s32.totalorder %s129, 0
    %s132 = sadd.s32 %s131, 1
    %s133 = scalar_select %p130, %s131, %s132
    %p136 = pneg %p130
    %p137 = scmp.eq.s32.totalorder %s11, 1
    %p138 = por %p136, %p137
    %p139 = scmp.ne.s32.totalorder %s131, %s134
    %p140 = scmp.eq.s32.totalorder %s11, 0
    %p141 = por %p139, %p140
    %p142 = scmp.ne.s32.totalorder %s131, %s134
    %p143 = scmp.eq.s32.totalorder %s16, 1
    %p144 = por %p142, %p143
    %p145 = scmp.ne.s32.totalorder %s134, %s135
    %p146 = scmp.eq.s32.totalorder %s16, 0
    %p147 = por %p145, %p146
    %p148 = scmp.ne.s32.totalorder %s134, %s135
    %p149 = scmp.eq.s32.totalorder %s17, 1
    %p150 = por %p148, %p149
    %p152 = scmp.ne.s32.totalorder %s135, %s151
    %p153 = scmp.eq.s32.totalorder %s17, 0
    %p154 = por %p152, %p153
    %p155 = scmp.le.s32.totalorder 1, %s11
    %p156 = scmp.lt.s32.totalorder %s11, 3
    %p157 = pnand %p155, %p156
    %p158 = pneg %p157
    // Predicated region
    $region9: #{tpu_custom_call.1} parent=5 // pred_check
      _
    $region10: #{tpu_custom_call.1} parent=5 // pred_check_branch
      %160 = sbr.rel (%p157) target = $region12
    $region11: #{tpu_custom_call.1} parent=5 // pred_region
      %s161 = ssub.s32 %s11, 1
      // Predicated region
      $region13: #{tpu_custom_call.1} parent=11 // pred_check
        %p162 = pneg %p58
      $region14: #{tpu_custom_call.1} parent=11 // pred_check_branch
        %164 = sbr.rel (%p162) target = $region16
      $region15: #{tpu_custom_call.1} parent=11 // pred_region
        _
      $region16: #{tpu_custom_call.1} parent=11 // pred_fallthru
        _
      // Predicated region
      $region17: #{tpu_custom_call.1} parent=11 // pred_check
        %p165 = pneg %p79
      $region18: #{tpu_custom_call.1} parent=11 // pred_check_branch
        %167 = sbr.rel (%p165) target = $region20
      $region19: #{tpu_custom_call.1} parent=11 // pred_region
        _
      $region20: #{tpu_custom_call.1} parent=11 // pred_fallthru
        _
      // Predicated region
      $region21: #{tpu_custom_call.1} parent=11 // pred_check
        %p168 = pneg %p100
      $region22: #{tpu_custom_call.1} parent=11 // pred_check_branch
        %170 = sbr.rel (%p168) target = $region24
      $region23: #{tpu_custom_call.1} parent=11 // pred_region
        _
      $region24: #{tpu_custom_call.1} parent=11 // pred_fallthru
        _
      // Predicated region
      $region25: #{tpu_custom_call.1} parent=11 // pred_check
        %p171 = pneg %p121
      $region26: #{tpu_custom_call.1} parent=11 // pred_check_branch
        %173 = sbr.rel (%p171) target = $region28
      $region27: #{tpu_custom_call.1} parent=11 // pred_region
        _
      $region28: #{tpu_custom_call.1} parent=11 // pred_fallthru
        _
    $region12: #{tpu_custom_call.1} parent=5 // pred_fallthru
      _
    %p174 = scmp.lt.s32.totalorder %s11, 2
    // Predicated region
    $region29: #{tpu_custom_call.1} parent=5 // pred_check
      %p175 = pneg %p174
    $region30: #{tpu_custom_call.1} parent=5 // pred_check_branch
      %177 = sbr.rel (%p175) target = $region32
    $region31: #{tpu_custom_call.1} parent=5 // pred_region
      // Predicated region
      $region33: #{tpu_custom_call.1} parent=31 // pred_check
        %p178 = pneg %p31
      $region34: #{tpu_custom_call.1} parent=31 // pred_check_branch
        %180 = sbr.rel (%p178) target = $region36
      $region35: #{tpu_custom_call.1} parent=31 // pred_region
        %s181 = smul.u32 4, %s11
        %p182 = scmp.lt.s32.totalorder %s181, 7
        %s183 = scalar_select %p182, %s181, 7
        %s184 = smul.addr %s183, 8
        %s185 = scalar_lea.vmem %s0, %s184
        %s186 = smul.u32 4, %s11
      $region36: #{tpu_custom_call.1} parent=31 // pred_fallthru
        _
    $region32: #{tpu_custom_call.1} parent=5 // pred_fallthru
      _
    %p187 = scmp.le.s32.totalorder 1, %s11
    %p188 = scmp.lt.s32.totalorder %s11, 3
    %p189 = pnand %p187, %p188
    %p190 = pneg %p189
    // Predicated region
    $region37: #{tpu_custom_call.1} parent=5 // pred_check
      _
    $region38: #{tpu_custom_call.1} parent=5 // pred_check_branch
      %192 = sbr.rel (%p189) target = $region40
    $region39: #{tpu_custom_call.1} parent=5 // pred_region
      %s193 = ssub.s32 %s11, 1
      %s194 = smul.u32 4, %s16
      %p195 = scmp.lt.s32.totalorder %s194, 7
      %s196 = scalar_select %p195, %s194, 7
      %s197 = smul.addr %s196, 8
      %s198 = scalar_lea.vmem %s0, %s197
      %p199 = pneg %p37
      %p200 = pneg %p34
      %p201 = pneg %p58
      %p202 = pneg %p55
      %p203 = pneg %p79
      %p204 = pneg %p76
      %p205 = pneg %p100
      %p206 = pneg %p97
      %p207 = pneg %p121
      %p208 = pneg %p118
      %p209 = pneg %p147
      %p210 = pneg %p144
      %s211 = smul.u32 4, %s16
      %p212 = scmp.lt.s32.totalorder %s211, 7
      %s213 = scalar_select %p212, %s211, 7
      %s214 = smul.addr %s213, 8
      %s215 = scalar_lea.vmem %s5, %s214
      %s216 = smul.u32 4, %s16
      %p217 = scmp.lt.s32.totalorder %s216, 7
      %s218 = scalar_select %p217, %s216, 7
      %s219 = smul.addr %s218, 8
      %s220 = scalar_lea.vmem %s0, %s219
      %s221 = smul.u32 4, %s16
      %s222 = smul.u32 4, %s16
      %p223 = scmp.lt.s32.totalorder %s222, 7
      %s224 = scalar_select %p223, %s222, 7
      %s225 = smul.addr %s224, 8
      %s226 = scalar_lea.vmem %s5, %s225
      %s227 = smul.u32 4, %s16
      %v229 = vld [vmem:[%s220] sm:$0xff]
      %v230 = vld [vmem:[%s220 + $0x8] sm:$0xff]
      %v231 = vld [vmem:[%s220 + $0x10] sm:$0xff]
      %v232 = vld [vmem:[%s220 + $0x18] sm:$0xff]
      %v233 = vpack.c.bf16 %v230, %v229
      %v234 = vpack.c.bf16 %v232, %v231
      %v235 = vld [vmem:[%s1] sm:$0xf]
      %v236 = vld [vmem:[%s1 + $0x4] sm:$0xf]
      %v237 = vld [vmem:[%s1 + $0x8] sm:$0xf]
      %v238 = vld [vmem:[%s1 + $0xc] sm:$0xf]
      %v239 = vld [vmem:[%s2] sm:$0x1]
      %v241 = vperm.slane %v239, 0
      %v247 = vunpack.c.l.b16 %v235
      %v248 = vunpack.c.l.b16 %v236
      %v249 = vunpack.c.l.b16 %v237
      %v250 = vunpack.c.l.b16 %v238
      %v251 = vpack.c.b16 %v248, %v247
      %v252 = vpack.c.b16 %v250, %v249
      %vm255 = vcmask 261120
      %v257 = vsel %vm255, %v233, 0
      %v260 = vsel %vm255, %v234, 0
      %262 = vmatpush.bf16.msra.mxu0 0
      %263 = vmatpush.bf16.msra.mxu0 0
      %264 = vmatpush.bf16.msra.mxu0 0
      %265 = vmatpush.bf16.msra.mxu0 0
      %266 = vmatpush.bf16.msra.mxu0 0
      %267 = vmatpush.bf16.msra.mxu0 0
      %268 = vmatpush.bf16.msra.mxu0 %v252
      %269 = vmatpush.bf16.msra.mxu0 %v251
      %270 = vmatmul.bf16.gmra.mxu0 %v257
      %v271 = vpop.f32.mrf.mxu0
      %v272 = vadd.f32 %v241, %v271
      %v273 = vpop.f32.mrf.mxu0
      %v274 = vadd.f32 %v241, %v273
      %275 = vmatmul.bf16.gmra.mxu0 %v260
      %v276 = vpop.f32.mrf.mxu0
      %v277 = vadd.f32 %v241, %v276
      %v278 = vpop.f32.mrf.mxu0
      %v279 = vadd.f32 %v241, %v278
      %280 = vdwg.mxu0
      %v281 = vmax.f32 %v272, 0.0
      %v282 = vmax.f32 %v274, 0.0
      %v283 = vmax.f32 %v277, 0.0
      %v284 = vmax.f32 %v279, 0.0
      %v285 = vpack.c.bf16 %v282, %v281
      %v286 = vpack.c.bf16 %v284, %v283
      %v287 = vld [vmem:[%s3] sm:$0xf]
      %v288 = vld [vmem:[%s3 + $0x4] sm:$0xf]
      %v289 = vld [vmem:[%s3 + $0x8] sm:$0xf]
      %v290 = vld [vmem:[%s3 + $0xc] sm:$0xf]
      %v291 = vld [vmem:[%s3 + $0x10] sm:$0xf]
      %v292 = vld [vmem:[%s3 + $0x14] sm:$0xf]
      %v293 = vld [vmem:[%s3 + $0x18] sm:$0xf]
      %v294 = vld [vmem:[%s3 + $0x1c] sm:$0xf]
      %v295 = vld [vmem:[%s4] sm:$0x1]
      %v297 = vperm.slane %v295, 0
      %v307 = vunpack.c.l.b16 %v287
      %v308 = vunpack.c.l.b16 %v288
      %v309 = vunpack.c.l.b16 %v289
      %v310 = vunpack.c.l.b16 %v290
      %v311 = vunpack.c.l.b16 %v291
      %v312 = vunpack.c.l.b16 %v292
      %v313 = vunpack.c.l.b16 %v293
      %v314 = vunpack.c.l.b16 %v294
      %v315 = vpack.c.b16 %v308, %v307
      %v316 = vpack.c.b16 %v310, %v309
      %v317 = vpack.c.b16 %v312, %v311
      %v318 = vpack.c.b16 %v314, %v313
      %vm323 = vcmask 523264
      %v325 = vsel %vm323, %v285, 0
      %v328 = vsel %vm323, %v286, 0
      %330 = vmatpush.bf16.msra.mxu0 0
      %331 = vmatpush.bf16.msra.mxu0 0
      %332 = vmatpush.bf16.msra.mxu0 0
      %333 = vmatpush.bf16.msra.mxu0 0
      %334 = vmatpush.bf16.msra.mxu0 %v318
      %335 = vmatpush.bf16.msra.mxu0 %v317
      %336 = vmatpush.bf16.msra.mxu0 %v316
      %337 = vmatpush.bf16.msra.mxu0 %v315
      %338 = vmatmul.bf16.gmra.mxu0 %v325
      %v339 = vpop.f32.mrf.mxu0
      %v340 = vadd.f32 %v297, %v339
      %v341 = vpop.f32.mrf.mxu0
      %v342 = vadd.f32 %v297, %v341
      %343 = vmatmul.bf16.gmra.mxu0 %v328
      %v344 = vpop.f32.mrf.mxu0
      %v345 = vadd.f32 %v297, %v344
      %v346 = vpop.f32.mrf.mxu0
      %v347 = vadd.f32 %v297, %v346
      %348 = vdwg.mxu0
      %349 = vst.msk [vmem:[%s226] sm:$0xff] %vm255, %v340
      %350 = vst.msk [vmem:[%s226 + $0x8] sm:$0xff] %vm255, %v342
      %351 = vst.msk [vmem:[%s226 + $0x10] sm:$0xff] %vm255, %v345
      %352 = vst.msk [vmem:[%s226 + $0x18] sm:$0xff] %vm255, %v347
      %s353 = smul.u32 4, %s16
      %p354 = scmp.lt.s32.totalorder %s353, 7
      %s355 = scalar_select %p354, %s353, 7
      %s356 = smul.addr %s355, 8
      %s357 = scalar_lea.vmem %s5, %s356
      // Predicated region
      $region41: #{tpu_custom_call.1} parent=39 // pred_check
        %p358 = pneg %p144
      $region42: #{tpu_custom_call.1} parent=39 // pred_check_branch
        %360 = sbr.rel (%p358) target = $region44
      $region43: #{tpu_custom_call.1} parent=39 // pred_region
        %s361 = smul.u32 4, %s16
      $region44: #{tpu_custom_call.1} parent=39 // pred_fallthru
        _
    $region40: #{tpu_custom_call.1} parent=5 // pred_fallthru
      _
    %p362 = scmp.le.s32.totalorder 2, %s11
    // Predicated region
    $region45: #{tpu_custom_call.1} parent=5 // pred_check
      %p363 = pneg %p362
    $region46: #{tpu_custom_call.1} parent=5 // pred_check_branch
      %365 = sbr.rel (%p363) target = $region48
    $region47: #{tpu_custom_call.1} parent=5 // pred_region
      %s366 = ssub.s32 %s11, 2
      // Predicated region
      $region49: #{tpu_custom_call.1} parent=47 // pred_check
        %p367 = pneg %p150
      $region50: #{tpu_custom_call.1} parent=47 // pred_check_branch
        %369 = sbr.rel (%p367) target = $region52
      $region51: #{tpu_custom_call.1} parent=47 // pred_region
        %s370 = smul.u32 4, %s17
        %p371 = scmp.lt.s32.totalorder %s370, 7
        %s372 = scalar_select %p371, %s370, 7
        %s373 = smul.addr %s372, 8
        %s374 = scalar_lea.vmem %s5, %s373
      $region52: #{tpu_custom_call.1} parent=47 // pred_fallthru
        _
    $region48: #{tpu_custom_call.1} parent=5 // pred_fallthru
      _
  $region6: #{tpu_custom_call.1} parent=0 // loop_footer
    %s15 = sadd.s32 1, %s11
  $region7: #{tpu_custom_call.1} parent=0 // loop_footer_branch
    %10 = sbr.rel target = $region3
  $region8: #{tpu_custom_call.1} parent=0 // loop_exit
    _

</llo_original>
